<compile_context>
chip_gen: v6e
topology: v6e:2x2x1
jax: 0.10.0
libtpu: 0.0.40
codegen_flags: <defaults>
</compile_context>

<pallas_src>
import jax
import jax.numpy as jnp
import numpy as np
from jax.experimental import pallas as pl
from jax.experimental.pallas import tpu as pltpu


_VMEM = pl.BlockSpec(memory_space=pltpu.MemorySpace.VMEM)


# ----------------------------------------------------------------------------
# Kernels
# ----------------------------------------------------------------------------
def enc_proj_kernel(enc_ref, we_ref, battn_ref, out_ref):
    # enc_ref [B*S, De], we_ref [De, Dd], battn_ref [1, Dd] -> out_ref [B*S, Dd]
    out_ref[...] = (
        jnp.dot(enc_ref[...], we_ref[...], preferred_element_type=jnp.float32)
        + battn_ref[...])


def attention_step_kernel(hidden_ref, encb_ref, wh_ref, v_ref, out_ref):
    # hidden_ref [T*B, Dd]   encb_ref [B, S, Dd]   wh_ref [Dd, Dd]
    # v_ref      [1, Dd]     (pre-scaled by 1/temperature)
    # out_ref    [T*B, S]    (src_len on the lane axis -> lane-dense stores)
    TB = hidden_ref.shape[0]
    B, S, Dd = encb_ref.shape
    T = TB // B

    # Single flattened MXU matmul covering all T fused decode steps.
    hid_proj = jnp.dot(hidden_ref[...], wh_ref[...],
                       preferred_element_type=jnp.float32)          # [T*B, Dd]

    enc_b = encb_ref[...]                                           # [B, S, Dd]
    if T > 1:
        # Replicate the decode-invariant projection across the fused T steps
        # (leading-dim concat; rows are ordered t*B + b to match hidden_ref).
        enc_b = jnp.concatenate([enc_b] * T, axis=0)                # [T*B, S, Dd]

    energy = jnp.tanh(enc_b + hid_proj[:, None, :])                 # [T*B, S, Dd]
    # v-projection; softmax temperature already folded into v_ref, b_v dropped
    # (a per-logit constant cancels under the softmax over src_len).
    score = jnp.sum(energy * v_ref[...][None, :, :], axis=-1)       # [T*B, S]

    # Numerically stable softmax over src_len (last / lane axis).
    score = score - jnp.max(score, axis=-1, keepdims=True)
    e = jnp.exp(score)
    denom = jnp.sum(e, axis=-1, keepdims=True)                      # [T*B, 1]
    # approx reciprocal rides the otherwise-idle EUP slot (~bf16-level error,
    # well inside the validation tolerance; use approx=False if downstream
    # consumers need tighter normalization).
    out_ref[...] = e * pl.reciprocal(denom, approx=True)


# ----------------------------------------------------------------------------
# Wrappers
# ----------------------------------------------------------------------------
def precompute_encoder_projection(encoder_outputs, folded_params):
    """Decode-invariant part: enc_b[b, s, :] = enc[s, b, :] @ W_e + b_attn.
    Call ONCE per source sequence and reuse for every decode step."""
    S, B, De = encoder_outputs.shape
    Dd = folded_params["w_e"].shape[1]
    enc_flat = jnp.transpose(encoder_outputs, (1, 0, 2)).reshape(B * S, De)
    enc_b = pl.pallas_call(
        enc_proj_kernel,
        out_shape=jax.ShapeDtypeStruct((B * S, Dd), jnp.float32),
        in_specs=[_VMEM, _VMEM, _VMEM],
        out_specs=_VMEM,
        cost_estimate=pl.CostEstimate(
            flops=2 * B * S * De * Dd,
            transcendentals=0,
            bytes_accessed=4 * (B * S * De + De * Dd + Dd + B * S * Dd)),
    )(enc_flat, folded_params["w_e"], folded_params["b_attn"])
    return enc_b.reshape(B, S, Dd)


def attention_from_projection(hidden, enc_b, folded_params):
    """Per-decode-step attention given the precomputed encoder projection.

    hidden: [B, Dd] (single step) or [T, B, Dd] (T fused decode steps)
    enc_b:  [B, S, Dd]
    Returns [S, B, 1] or [T, S, B, 1] (module layout)."""
    single_step = hidden.ndim == 2
    if single_step:
        hidden = hidden[None]
    T, B, Dd = hidden.shape
    _, S, _ = enc_b.shape

    scores = pl.pallas_call(
        attention_step_kernel,
        out_shape=jax.ShapeDtypeStruct((T * B, S), jnp.float32),
        in_specs=[_VMEM, _VMEM, _VMEM, _VMEM],
        out_specs=_VMEM,
        cost_estimate=pl.CostEstimate(
            flops=2 * T * B * Dd * Dd + 6 * T * B * S * Dd,
            transcendentals=T * B * S * (Dd + 2),
            bytes_accessed=4 * (T * B * Dd + B * S * Dd + Dd * Dd + Dd
                                + T * B * S)),
    )(hidden.reshape(T * B, Dd), enc_b, folded_params["w_h"],
      folded_params["v_w"])

    attn = jnp.transpose(scores.reshape(T, B, S), (0, 2, 1))[..., None]
    return attn[0] if single_step else attn          # [S,B,1] / [T,S,B,1]


def attention_forward(hidden, encoder_outputs, folded_params):
    """Module-equivalent API: Attention.forward(hidden, encoder_outputs).
    For decode loops, call precompute_encoder_projection once instead."""
    enc_b = precompute_encoder_projection(encoder_outputs, folded_params)
    return attention_from_projection(hidden, enc_b, folded_params)


def fold_params(params):
    """One-time prep (outside the decode loop): fold the softmax temperature
    (3) into the v projection; drop b_v (cancels under softmax over src_len)."""
    return {
        "w_h": params["w_h"],
        "w_e": params["w_e"],
        "b_attn": params["b_attn"],
        "v_w": params["v_w"] / 3.0,
    }


def init_params(key, enc_hid_dim, dec_hid_dim, bidirectional):
    """Deterministic synthetic init mirroring the nn.Linear shapes."""
    enc_total = enc_hid_dim * (1 + int(bidirectional))
    cat_dim = enc_total + dec_hid_dim
    k1, k2, k3, k4, k5 = jax.random.split(key, 5)
    bound_attn = 1.0 / np.sqrt(cat_dim)
    bound_v = 1.0 / np.sqrt(dec_hid_dim)
    # attn.weight acts on cat = [hidden | enc]; split into the two sub-blocks.
    w_h = jax.random.uniform(k1, (dec_hid_dim, dec_hid_dim), jnp.float32,
                             -bound_attn, bound_attn)
    w_e = jax.random.uniform(k2, (enc_total, dec_hid_dim), jnp.float32,
                             -bound_attn, bound_attn)
    b_attn = jax.random.uniform(k3, (1, dec_hid_dim), jnp.float32,
                                -bound_attn, bound_attn)
    v_w = jax.random.uniform(k4, (1, dec_hid_dim), jnp.float32,
                             -bound_v, bound_v)
    b_v = jax.random.uniform(k5, (1,), jnp.float32, -bound_v, bound_v)
    return {"w_h": w_h, "w_e": w_e, "b_attn": b_attn, "v_w": v_w, "b_v": b_v}


def reference_forward(hidden, encoder_outputs, params):
    """Pure-JAX f32 reference of the PyTorch forward (single decode step)."""
    S = encoder_outputs.shape[0]
    hid = jnp.broadcast_to(hidden[None], (S,) + hidden.shape)
    energy = jnp.tanh(hid @ params["w_h"] + encoder_outputs @ params["w_e"]
                      + params["b_attn"][0])
    attention = (jnp.sum(energy * params["v_w"][0], axis=-1, keepdims=True)
                 + params["b_v"][0])
    e_x = jnp.exp(attention / 3.0)
    return e_x / jnp.sum(e_x, axis=0)


if __name__ == "__main__":
    enc_hid_dim = 32
    dec_hid_dim = 32
    bidirectional = True
    src_len = 8
    batch = 2
    n_steps = 4   # decode steps fused into one per-step kernel launch

    key = jax.random.PRNGKey(0)
    kp, kh, ke = jax.random.split(key, 3)
    params = init_params(kp, enc_hid_dim, dec_hid_dim, bidirectional)

    hiddens = jax.random.normal(kh, (n_steps, batch, dec_hid_dim), jnp.float32)
    encoder_outputs = jax.random.normal(
        ke, (src_len, batch, enc_hid_dim * (1 + int(bidirectional))),
        jnp.float32)

    # Pure-JAX reference, one decode step at a time (matches the PyTorch module).
    refs = np.stack([np.asarray(reference_forward(hiddens[t], encoder_outputs,
                                                  params))
                     for t in range(n_steps)])

    folded = fold_params(params)

    # Decode-invariant encoder projection: one launch per source sequence.
    enc_b = jax.block_until_ready(
        precompute_encoder_projection(encoder_outputs, folded))
    assert enc_b.shape == (batch, src_len, dec_hid_dim)

    # --- single-step API (module signature), reusing the hoisted projection ---
    out_single = jax.block_until_ready(
        attention_from_projection(hiddens[0], enc_b, folded))
    assert out_single.shape == (src_len, batch, 1)
    assert np.allclose(np.asarray(out_single), refs[0], rtol=1e-2, atol=1e-3)

    # --- T decode steps fused into one launch ---
    out_multi = jax.block_until_ready(
        attention_from_projection(hiddens, enc_b, folded))
    assert out_multi.shape == (n_steps, src_len, batch, 1)
    assert np.allclose(np.asarray(out_multi), refs, rtol=1e-2, atol=1e-3)

    # --- module-equivalent API (projection + step in one call) ---
    out_module = jax.block_until_ready(
        attention_forward(hiddens[0], encoder_outputs, folded))
    assert out_module.shape == (src_len, batch, 1)
    assert np.allclose(np.asarray(out_module), refs[0], rtol=1e-2, atol=1e-3)

    print("KERNEL_OK")
</pallas_src>

<mosaic_0001>
module attributes {stable_mosaic.version = 11 : i64} {
  func.func @enc_proj_kernel(%arg0: memref<16x64xf32, #tpu.memory_space<vmem>>, %arg1: memref<64x32xf32, #tpu.memory_space<vmem>>, %arg2: memref<1x32xf32, #tpu.memory_space<vmem>>, %arg3: memref<16x32xf32, #tpu.memory_space<vmem>>) attributes {dimension_semantics = [], scalar_prefetch = 0 : i64, scratch_operands = 0 : i64, tpu.core_type = #tpu.core_type<tc>} {
    %c0 = arith.constant 0 : index
    %c0_0 = arith.constant 0 : index
    %0 = vector.load %arg0[%c0, %c0_0] : memref<16x64xf32, #tpu.memory_space<vmem>>, vector<16x64xf32>
    %c0_1 = arith.constant 0 : index
    %c0_2 = arith.constant 0 : index
    %1 = vector.load %arg1[%c0_1, %c0_2] : memref<64x32xf32, #tpu.memory_space<vmem>>, vector<64x32xf32>
    %cst = arith.constant dense<0.000000e+00> : vector<16x32xf32>
    %2 = tpu.matmul %0, %1, %cst {dimension_numbers = #tpu.dot_dimension_numbers<[1], [0], [0], [1], [0, 0, 1, 1], [], []>} : vector<16x64xf32>, vector<64x32xf32>, vector<16x32xf32> -> vector<16x32xf32>
    %c0_3 = arith.constant 0 : index
    %c0_4 = arith.constant 0 : index
    %3 = vector.load %arg2[%c0_3, %c0_4] : memref<1x32xf32, #tpu.memory_space<vmem>>, vector<1x32xf32>
    %4 = vector.broadcast %3 : vector<1x32xf32> to vector<16x32xf32>
    %5 = arith.addf %2, %4 : vector<16x32xf32>
    %c0_5 = arith.constant 0 : index
    %c0_6 = arith.constant 0 : index
    %6 = vector.load %arg3[%c0_5, %c0_6] : memref<16x32xf32, #tpu.memory_space<vmem>>, vector<16x32xf32>
    tpu.vector_store %arg3[%c0_5, %c0_6], %5 {strides = array<i32>} : memref<16x32xf32, #tpu.memory_space<vmem>>, vector<16x32xf32>,
    return
  }
}

</mosaic_0001>

<llo_original>
// kernel: tpu_custom_call.1
$region0: #{tpu_custom_call.1}
  #allocation0 [shape = 'u32[]', space=smem, size = 0x4, offset = 0x4, fixed_abs, tag = 'smem constant byte address 0x4 - core index']
  #allocation1 [shape = 'u32[144,128]{1,0:T(1,128)}', space=vmem, size = 0x12000, scoped, tag = 'internal scratch']
  %s0 = inlined_call_operand.vmem [shape: f32[16,64], index: 0, kind: input, shape index: {}]
  %s1 = inlined_call_operand.vmem [shape: f32[64,32], index: 1, kind: input, shape index: {}]
  %s2 = inlined_call_operand.vmem [shape: f32[1,32], index: 2, kind: input, shape index: {}]
  %s3 = inlined_call_operand.hbm [shape: f32[16,32], index: 3, kind: output, shape index: {}]
  %s4 = sld [smem:[#allocation0]]
  $region22: #{tpu_custom_call.1} parent=0
    _
  %s6 = ssub.s32 1, %s4
  %s7 = scalar_select 0, %s6, %s4
  $region1: #{tpu_custom_call.1} parent=0
    #allocation2 [shape = 'u8[8192]{0}', space=vmem, size = 0x2000, scoped, tag = 'output window, operand 0, single buffered']
    #allocation3 [shape = 's32[1]{0}', space=sflag, size = 0x4, scoped, tag = 'scoped memory for tpu_custom_call.1']
    %8 = vsyncpa [#allocation3], 0
    // Predicated region
    $region2: #{tpu_custom_call.1} parent=1 // pred_check
      _
    $region3: #{tpu_custom_call.1} parent=1 // pred_check_branch
      %10 = sbr.rel (0) target = $region5
    $region4: #{tpu_custom_call.1} parent=1 // pred_region
      _
    $region5: #{tpu_custom_call.1} parent=1 // pred_fallthru
      _
    // Predicated region
    $region6: #{tpu_custom_call.1} parent=1 // pred_check
      _
    $region7: #{tpu_custom_call.1} parent=1 // pred_check_branch
      %12 = sbr.rel (0) target = $region9
    $region8: #{tpu_custom_call.1} parent=1 // pred_region
      _
    $region9: #{tpu_custom_call.1} parent=1 // pred_fallthru
      _
    // Predicated region
    $region10: #{tpu_custom_call.1} parent=1 // pred_check
      _
    $region11: #{tpu_custom_call.1} parent=1 // pred_check_branch
      %14 = sbr.rel (0) target = $region13
    $region12: #{tpu_custom_call.1} parent=1 // pred_region
      _
    $region13: #{tpu_custom_call.1} parent=1 // pred_fallthru
      _
    %v15 = vld [vmem:[%s0] sm:$0xff]
    %v16 = vld [vmem:[%s0 + $0x8] sm:$0xff]
    %v17 = vld [vmem:[%s1] sm:$0xff]
    %v18 = vld [vmem:[%s1 + $0x8] sm:$0xff]
    %v19 = vld [vmem:[%s1 + $0x10] sm:$0xff]
    %v20 = vld [vmem:[%s1 + $0x18] sm:$0xff]
    %v21 = vld [vmem:[%s1 + $0x20] sm:$0xff]
    %v22 = vld [vmem:[%s1 + $0x28] sm:$0xff]
    %v23 = vld [vmem:[%s1 + $0x30] sm:$0xff]
    %v24 = vld [vmem:[%s1 + $0x38] sm:$0xff]
    %v25 = vld [vmem:[%s2] sm:$0x1]
    %v27 = vlaneseq
    %v28 = vshrl.u32 %v27, 7
    %v29 = vsub.s32 0, %v28
    %v30 = vrot.slane %v25, %v29
    %vm32 = vcmask 523264
    %v34 = vsel %vm32, %v15, 0
    %v37 = vsel %vm32, %v16, 0
    %39 = vmatprep.subr.mxu0 0.0
    %40 = vmatpush1.msra.mxu0 0.0
    %41 = vmatprep.subr.mxu0 0.0
    %42 = vmatpush1.msra.mxu0 0.0
    %43 = vmatprep.subr.mxu0 0.0
    %44 = vmatpush1.msra.mxu0 0.0
    %45 = vmatprep.subr.mxu0 0.0
    %46 = vmatpush1.msra.mxu0 0.0
    %47 = vmatprep.subr.mxu0 0.0
    %48 = vmatpush1.msra.mxu0 0.0
    %49 = vmatprep.subr.mxu0 0.0
    %50 = vmatpush1.msra.mxu0 0.0
    %51 = vmatprep.subr.mxu0 0.0
    %52 = vmatpush1.msra.mxu0 0.0
    %53 = vmatprep.subr.mxu0 0.0
    %54 = vmatpush1.msra.mxu0 0.0
    %55 = vmatprep.subr.mxu0 0.0
    %56 = vmatpush1.msra.mxu0 %v24
    %57 = vmatprep.subr.mxu0 0.0
    %58 = vmatpush1.msra.mxu0 %v23
    %59 = vmatprep.subr.mxu0 0.0
    %60 = vmatpush1.msra.mxu0 %v22
    %61 = vmatprep.subr.mxu0 0.0
    %62 = vmatpush1.msra.mxu0 %v21
    %63 = vmatprep.subr.mxu0 0.0
    %64 = vmatpush1.msra.mxu0 %v20
    %65 = vmatprep.subr.mxu0 0.0
    %66 = vmatpush1.msra.mxu0 %v19
    %67 = vmatprep.subr.mxu0 0.0
    %68 = vmatpush1.msra.mxu0 %v18
    %69 = vmatprep.subr.mxu0 0.0
    %70 = vmatpush1.msra.mxu0 %v17
    %71 = vmatprep.subr.mxu0 0.0
    %72 = vmatpush2.msra.mxu0 0.0
    %73 = vmatprep.subr.mxu0 0.0
    %74 = vmatpush2.msra.mxu0 0.0
    %75 = vmatprep.subr.mxu0 0.0
    %76 = vmatpush2.msra.mxu0 0.0
    %77 = vmatprep.subr.mxu0 0.0
    %78 = vmatpush2.msra.mxu0 0.0
    %79 = vmatprep.subr.mxu0 0.0
    %80 = vmatpush2.msra.mxu0 0.0
    %81 = vmatprep.subr.mxu0 0.0
    %82 = vmatpush2.msra.mxu0 0.0
    %83 = vmatprep.subr.mxu0 0.0
    %84 = vmatpush2.msra.mxu0 0.0
    %85 = vmatprep.subr.mxu0 0.0
    %86 = vmatpush2.msra.mxu0 0.0
    %87 = vmatprep.subr.mxu0 0.0
    %88 = vmatpush2.msra.mxu0 0.0
    %89 = vmatprep.subr.mxu0 0.0
    %90 = vmatpush2.msra.mxu0 0.0
    %91 = vmatprep.subr.mxu0 0.0
    %92 = vmatpush2.msra.mxu0 0.0
    %93 = vmatprep.subr.mxu0 0.0
    %94 = vmatpush2.msra.mxu0 0.0
    %95 = vmatprep.subr.mxu0 0.0
    %96 = vmatpush2.msra.mxu0 0.0
    %97 = vmatprep.subr.mxu0 0.0
    %98 = vmatpush2.msra.mxu0 0.0
    %99 = vmatprep.subr.mxu0 0.0
    %100 = vmatpush2.msra.mxu0 0.0
    %101 = vmatprep.subr.mxu0 0.0
    %102 = vmatpush2.msra.mxu0 0.0
    %103 = vmatprep.mubr.f32.mxu0 0.0
    %104 = vmatmul.mubr.f32.gmra.mxu0 %v34
    %v105 = vpop.f32.mrf.mxu0
    %v106 = vadd.f32 %v30, %v105
    %v107 = vpop.f32.mrf.mxu0
    %108 = vmatprep.mubr.f32.mxu0 0.0
    %109 = vmatmul.mubr.f32.gmra.mxu0 %v37
    %v110 = vpop.f32.mrf.mxu0
    %v111 = vadd.f32 %v30, %v110
    %v112 = vpop.f32.mrf.mxu0
    %113 = vdwg.mxu0
    %vm114 = vcmask 261120
    %115 = vst.msk [vmem:[#allocation2] sm:$0xff] %vm114, %v106
    %116 = vst.msk [vmem:[#allocation2 + $0x8] sm:$0xff] %vm114, %v111
    // Predicated region
    $region14: #{tpu_custom_call.1} parent=1 // pred_check
      _
    $region15: #{tpu_custom_call.1} parent=1 // pred_check_branch
      %118 = sbr.rel (0) target = $region17
    $region16: #{tpu_custom_call.1} parent=1 // pred_region
      %s120 = ssub.s32 256, 256
      %121 = vsyncadd [#allocation3], %s120
      %s122 = sshll.u32 [#allocation2], 4
      %s123 = int_to_ptr.vmem [resolvable:$true] %s122
      %128 = dma.vmem_to_hbm [thread:$0]  %s123, 256, %s3, [#allocation3], 128, 128, 8
    $region17: #{tpu_custom_call.1} parent=1 // pred_fallthru
      _
    // Predicated region
    $region18: #{tpu_custom_call.1} parent=1 // pred_check
      _
    $region19: #{tpu_custom_call.1} parent=1 // pred_check_branch
      %130 = sbr.rel (0) target = $region21
    $region20: #{tpu_custom_call.1} parent=1 // pred_region
      %131 = dma.done [#allocation3], 256
    $region21: #{tpu_custom_call.1} parent=1 // pred_fallthru
      _
    %132 = vsyncpa [#allocation3], 1

</llo_original>
